<compile_context>
chip_gen: v5e
topology: v5e:2x2
jax: 0.10.0
libtpu: 0.0.40
codegen_flags: <defaults>
</compile_context>

<pallas_src>
import functools

import jax
import jax.numpy as jnp
from jax import lax
from jax.experimental import pallas as pl
from jax.experimental.pallas import tpu as pltpu


def _round_up(x, m):
    return (x + m - 1) // m * m


def _cdiv(a, b):
    return (a + b - 1) // b


def _node_kernel(op_feats_ref, op_code_ref, bidx_ref, w_feat_ref, w_oh_ref,
                 out_ref, *, num_ops):
    """out = op_feats @ w_feat_rep
           + [onehot(op_code) | onehot(batch_idx)] @ [emb_rep ; cfg_slab]

    Lane-dense (TM, LANE_BLK) result, f32 accumulation, single store."""
    tm = op_feats_ref.shape[0]
    koh = w_oh_ref.shape[0]

    # Combined one-hot slab: columns [0, num_ops) one-hot op_code,
    # columns [num_ops, num_ops + G) one-hot batch_idx; padding columns never match.
    # (An out-of-range batch_idx >= G silently yields a zero config row.)
    col = lax.broadcasted_iota(jnp.int32, (tm, koh), 1)
    tgt = jnp.where(col < num_ops, op_code_ref[...], bidx_ref[...] + num_ops)
    oh = (col == tgt).astype(jnp.float32)

    acc = jnp.dot(op_feats_ref[...], w_feat_ref[...],
                  preferred_element_type=jnp.float32)
    acc = acc + jnp.dot(oh, w_oh_ref[...], preferred_element_type=jnp.float32)
    out_ref[...] = acc.astype(out_ref.dtype)


def tpu_graph_encoder(op_feats, op_code, batch_idx, config_feats, params, *,
                      tm=512, max_lane_block=4096, out_dtype=jnp.float32):
    """Pallas implementation of TPUGraphEncoder.forward (posenc_dim=-1, edge_dim=-1,
    dense per-graph-config branch, i.e. no 'config_feats_full' in batch)."""
    N, F = op_feats.shape
    G, C, K = config_feats.shape
    num_ops, D = params["emb"].shape
    f32 = jnp.float32

    # ---- one-time parameter transforms (weight transforms, outside the kernel) ----
    emb = params["emb"].astype(f32)
    norm = jnp.sqrt(jnp.sum(emb * emb, axis=-1, keepdims=True))
    emb_rn = emb * jnp.where(norm > 1.0, 1.0 / (norm + 1e-7), 1.0)   # nn.Embedding(max_norm=True)
    emb_scaled = params["op_w"][0, 0] * emb_rn                        # op_weights folded in (keep f32!)

    # Tiny per-graph config projection -> XLA einsum (kernel launch not worth it).
    # config_weights folded into w_cfg; BOTH biases folded into the projection.
    w_cfg_s = params["cfg_w"].reshape(K, 1).astype(f32) * params["w_cfg"].astype(f32)
    b_sum = params["b_op"].astype(f32) + params["b_cfg"].astype(f32)
    cfg_proj = jnp.einsum("gck,kd->gcd", config_feats.astype(f32), w_cfg_s) + b_sum   # (G, C, D)

    # ---- lane-dense, 128-aligned output layout over the flattened C*D dim ----
    CD = C * D
    cd128 = _round_up(CD, 128)
    n_lane = _cdiv(cd128, _round_up(max_lane_block, 128))   # config/lane chunks (v7x VMEM bound)
    lane_blk = _round_up(_cdiv(cd128, n_lane), 128)
    CDp = lane_blk * n_lane

    def lane_pad(a):                                          # (rows, CD) -> (rows, CDp)
        return a if CDp == CD else jnp.pad(a, ((0, 0), (0, CDp - CD)))

    w_feat_rep = lane_pad(jnp.tile(params["w_op"].astype(f32), (1, C)))   # (F, CDp)
    emb_rep = lane_pad(jnp.tile(emb_scaled, (1, C)))                      # (num_ops, CDp)
    cfg_slab = lane_pad(cfg_proj.reshape(G, CD))                          # (G, CDp)

    koh = _round_up(num_ops + G, 8)
    w_oh = jnp.zeros((koh, CDp), f32)
    w_oh = w_oh.at[:num_ops].set(emb_rep).at[num_ops:num_ops + G].set(cfg_slab)

    # ---- node-row tiling (TM aligned to the output dtype's sublane quantum) ----
    row_align = 8 * (4 // jnp.dtype(out_dtype).itemsize)      # f32: 8, bf16: 16
    TM = max(row_align, min(_round_up(tm, row_align), _round_up(N, row_align)))
    n_rows = _cdiv(N, TM)

    opc = op_code.astype(jnp.int32).reshape(N, 1)
    bix = batch_idx.astype(jnp.int32).reshape(N, 1)

    out = pl.pallas_call(
        functools.partial(_node_kernel, num_ops=num_ops),
        out_shape=jax.ShapeDtypeStruct((N, CDp), out_dtype),
        grid=(n_rows, n_lane),
        in_specs=[
            pl.BlockSpec((TM, F), lambda i, j: (i, 0)),          # op_feats, no padded copy
            pl.BlockSpec((TM, 1), lambda i, j: (i, 0)),          # op_code
            pl.BlockSpec((TM, 1), lambda i, j: (i, 0)),          # batch_idx
            pl.BlockSpec((F, lane_blk), lambda i, j: (0, j)),    # replicated op-linear weight
            pl.BlockSpec((koh, lane_blk), lambda i, j: (0, j)),  # [emb_rep ; cfg_slab]
        ],
        out_specs=pl.BlockSpec((TM, lane_blk), lambda i, j: (i, j)),
        compiler_params=pltpu.CompilerParams(
            dimension_semantics=("parallel", "parallel"),
            vmem_limit_bytes=48 * 1024 * 1024),                  # <= 64 MiB physical on v7x
    )(op_feats.astype(f32), opc, bix, w_feat_rep, w_oh)

    if CDp != CD:
        out = out[:, :CD]
    # TODO(synk): posenc_lin branch skipped (posenc_dim=-1 in module defaults).
    # TODO(synk): sinusoidal edge encoding + add_remaining_self_loops skipped (edge_dim=-1 default).
    # TODO(synk): 'config_feats_full' scatter-add branch not implemented (dense per-graph branch only).
    return out.reshape(N, C, D)


def init_params(key, num_feat, num_config_feat, num_ops, dim_in, init_factor=100.0):
    k_emb, k_wop, k_bop, k_wc, k_bc = jax.random.split(key, 5)

    def lin_init(kw, kb, fan_in, fan_out):
        bound = 1.0 / jnp.sqrt(fan_in)
        w = jax.random.uniform(kw, (fan_in, fan_out), jnp.float32, -bound, bound)
        b = jax.random.uniform(kb, (1, fan_out), jnp.float32, -bound, bound)
        return w, b

    w_op, b_op = lin_init(k_wop, k_bop, num_feat, dim_in)
    w_cfg, b_cfg = lin_init(k_wc, k_bc, num_config_feat, dim_in)
    return {
        "emb": jax.random.normal(k_emb, (num_ops, dim_in), jnp.float32),  # N(0,1) like nn.Embedding
        "w_op": w_op, "b_op": b_op,
        "w_cfg": w_cfg, "b_cfg": b_cfg,
        "op_w": jnp.full((1, 1), init_factor, jnp.float32),
        "cfg_w": jnp.full((1, num_config_feat), init_factor, jnp.float32),
    }


def reference(op_feats, op_code, batch_idx, config_feats, params):
    emb = params["emb"]
    norms = jnp.sqrt(jnp.sum(emb * emb, axis=-1, keepdims=True))
    emb = emb * jnp.where(norms > 1.0, 1.0 / (norms + 1e-7), 1.0)
    op_emb = params["op_w"][0, 0] * emb[op_code]
    x = op_feats @ params["w_op"] + params["b_op"] + op_emb                           # (N, D)
    cfg = (config_feats * params["cfg_w"][None]) @ params["w_cfg"] + params["b_cfg"]  # (G, C, D)
    return x[:, None, :] + cfg[batch_idx]                                             # (N, C, D)


if __name__ == "__main__":
    # shapes from get_shapes(cfg): custom=False, tpu_task='layout', normalize=True
    num_config_feat, num_feat, num_ops = 18, 112, 120
    dim_in = 32
    N, G, C = 16, 2, 4  # nodes, graphs, configs-per-graph

    key = jax.random.PRNGKey(0)
    kp, k1, k2, k3 = jax.random.split(key, 4)
    params = init_params(kp, num_feat, num_config_feat, num_ops, dim_in)

    op_feats = jax.random.normal(k1, (N, num_feat), jnp.float32)
    op_code = jax.random.randint(k2, (N,), 0, num_ops, jnp.int32)
    config_feats = jax.random.normal(k3, (G, C, num_config_feat), jnp.float32)
    # graph boundary deliberately NOT aligned to the 8-row node tile
    batch_idx = jnp.array([0] * 7 + [1] * 9, jnp.int32)

    out = tpu_graph_encoder(op_feats, op_code, batch_idx, config_feats, params, tm=8)
    out = jax.block_until_ready(out)

    ref = reference(op_feats, op_code, batch_idx, config_feats, params)
    assert out.shape == (N, C, dim_in)
    assert jnp.allclose(out, ref, rtol=1e-3, atol=1e-2), "mismatch vs reference (f32)"

    # bf16 output path (halves the dominant HBM writeback in production); values are
    # O(100) because op_weights=100 is folded into the embedding, so tolerances scale.
    out_bf16 = tpu_graph_encoder(op_feats, op_code, batch_idx, config_feats, params,
                                 tm=8, out_dtype=jnp.bfloat16)
    out_bf16 = jax.block_until_ready(out_bf16)
    assert out_bf16.dtype == jnp.bfloat16
    assert jnp.allclose(out_bf16.astype(jnp.float32), ref, rtol=1e-2, atol=4.0), \
        "mismatch vs reference (bf16 output)"

    print("KERNEL_OK")
</pallas_src>

<mosaic_0001>
module attributes {stable_mosaic.version = 11 : i64} {
  func.func @_node_kernel(%arg0: i32, %arg1: i32, %arg2: memref<8x112xf32, #tpu.memory_space<vmem>>, %arg3: memref<8x1xi32, #tpu.memory_space<vmem>>, %arg4: memref<8x1xi32, #tpu.memory_space<vmem>>, %arg5: memref<112x128xf32, #tpu.memory_space<vmem>>, %arg6: memref<128x128xf32, #tpu.memory_space<vmem>>, %arg7: memref<8x128xf32, #tpu.memory_space<vmem>>) attributes {dimension_semantics = [#tpu.dimension_semantics<parallel>, #tpu.dimension_semantics<parallel>], iteration_bounds = array<i64: 2, 1>, scalar_prefetch = 0 : i64, scratch_operands = 0 : i64, tpu.core_type = #tpu.core_type<tc>, window_params = [{transform_indices = @transform_0, window_bounds = array<i64: 8, 112>}, {transform_indices = @transform_1, window_bounds = array<i64: 8, 1>}, {transform_indices = @transform_2, window_bounds = array<i64: 8, 1>}, {transform_indices = @transform_3, window_bounds = array<i64: 112, 128>}, {transform_indices = @transform_4, window_bounds = array<i64: 128, 128>}, {transform_indices = @transform_5, window_bounds = array<i64: 8, 128>}]} {
    %0 = tpu.iota {dimensions = array<i32: 1>} : vector<8x128xi32>
    %c120_i32 = arith.constant 120 : i32
    %1 = vector.broadcast %c120_i32 : i32 to vector<8x128xi32>
    %2 = arith.cmpi slt, %0, %1 : vector<8x128xi32>
    %c0 = arith.constant 0 : index
    %c0_0 = arith.constant 0 : index
    %3 = vector.load %arg3[%c0, %c0_0] : memref<8x1xi32, #tpu.memory_space<vmem>>, vector<8x1xi32>
    %c0_1 = arith.constant 0 : index
    %c0_2 = arith.constant 0 : index
    %4 = vector.load %arg4[%c0_1, %c0_2] : memref<8x1xi32, #tpu.memory_space<vmem>>, vector<8x1xi32>
    %c120_i32_3 = arith.constant 120 : i32
    %5 = vector.broadcast %c120_i32_3 : i32 to vector<8x1xi32>
    %6 = arith.addi %4, %5 : vector<8x1xi32>
    %7 = vector.shape_cast %3 : vector<8x1xi32> to vector<8x1xi32>
    %8 = vector.broadcast %7 : vector<8x1xi32> to vector<8x128xi32>
    %9 = vector.shape_cast %6 : vector<8x1xi32> to vector<8x1xi32>
    %10 = vector.broadcast %9 : vector<8x1xi32> to vector<8x128xi32>
    %11 = arith.select %2, %8, %10 : vector<8x128xi1>, vector<8x128xi32>
    %12 = arith.cmpi eq, %0, %11 : vector<8x128xi32>
    %13 = arith.extui %12 : vector<8x128xi1> to vector<8x128xi32>
    %14 = arith.sitofp %13 : vector<8x128xi32> to vector<8x128xf32>
    %c0_4 = arith.constant 0 : index
    %c0_5 = arith.constant 0 : index
    %15 = vector.load %arg2[%c0_4, %c0_5] : memref<8x112xf32, #tpu.memory_space<vmem>>, vector<8x112xf32>
    %c0_6 = arith.constant 0 : index
    %c0_7 = arith.constant 0 : index
    %16 = vector.load %arg5[%c0_6, %c0_7] : memref<112x128xf32, #tpu.memory_space<vmem>>, vector<112x128xf32>
    %cst = arith.constant dense<0.000000e+00> : vector<8x128xf32>
    %17 = tpu.matmul %15, %16, %cst {dimension_numbers = #tpu.dot_dimension_numbers<[1], [0], [0], [1], [0, 0, 1, 1], [], []>} : vector<8x112xf32>, vector<112x128xf32>, vector<8x128xf32> -> vector<8x128xf32>
    %c0_8 = arith.constant 0 : index
    %c0_9 = arith.constant 0 : index
    %18 = vector.load %arg6[%c0_8, %c0_9] : memref<128x128xf32, #tpu.memory_space<vmem>>, vector<128x128xf32>
    %cst_10 = arith.constant dense<0.000000e+00> : vector<8x128xf32>
    %19 = tpu.matmul %14, %18, %cst_10 {dimension_numbers = #tpu.dot_dimension_numbers<[1], [0], [0], [1], [0, 0, 1, 1], [], []>} : vector<8x128xf32>, vector<128x128xf32>, vector<8x128xf32> -> vector<8x128xf32>
    %20 = arith.addf %17, %19 : vector<8x128xf32>
    %c0_11 = arith.constant 0 : index
    %c0_12 = arith.constant 0 : index
    %21 = vector.load %arg7[%c0_11, %c0_12] : memref<8x128xf32, #tpu.memory_space<vmem>>, vector<8x128xf32>
    tpu.vector_store %arg7[%c0_11, %c0_12], %20 {strides = array<i32>} : memref<8x128xf32, #tpu.memory_space<vmem>>, vector<8x128xf32>,
    return
  }
  func.func @transform_0(%arg0: i32, %arg1: i32) -> (i32, i32) {
    %c0_i32 = arith.constant 0 : i32
    %c0_i32_0 = arith.constant 0 : i32
    return %arg0, %c0_i32 : i32, i32
  }
  func.func @transform_1(%arg0: i32, %arg1: i32) -> (i32, i32) {
    %c0_i32 = arith.constant 0 : i32
    %c0_i32_0 = arith.constant 0 : i32
    return %arg0, %c0_i32 : i32, i32
  }
  func.func @transform_2(%arg0: i32, %arg1: i32) -> (i32, i32) {
    %c0_i32 = arith.constant 0 : i32
    %c0_i32_0 = arith.constant 0 : i32
    return %arg0, %c0_i32 : i32, i32
  }
  func.func @transform_3(%arg0: i32, %arg1: i32) -> (i32, i32) {
    %c0_i32 = arith.constant 0 : i32
    %c0_i32_0 = arith.constant 0 : i32
    return %c0_i32, %arg1 : i32, i32
  }
  func.func @transform_4(%arg0: i32, %arg1: i32) -> (i32, i32) {
    %c0_i32 = arith.constant 0 : i32
    %c0_i32_0 = arith.constant 0 : i32
    return %c0_i32, %arg1 : i32, i32
  }
  func.func @transform_5(%arg0: i32, %arg1: i32) -> (i32, i32) {
    %c0_i32 = arith.constant 0 : i32
    return %arg0, %arg1 : i32, i32
  }
}

</mosaic_0001>

<llo_original>
// kernel: tpu_custom_call.1
$region0: #{tpu_custom_call.1}
  #allocation0 [shape = 'u32[]', space=smem, size = 0x4, offset = 0x4, fixed_abs, tag = 'smem constant byte address 0x4 - core index']
  #allocation1 [shape = 'u32[72,128]{1,0:T(1,128)}', space=vmem, size = 0x9000, scoped, tag = 'internal scratch']
  %s0 = inlined_call_operand.vmem [shape: f32[16,112], index: 0, kind: input, shape index: {}]
  %s1 = inlined_call_operand.vmem [shape: s32[16,1], index: 1, kind: input, shape index: {}]
  %s2 = inlined_call_operand.vmem [shape: s32[16,1], index: 2, kind: input, shape index: {}]
  %s3 = inlined_call_operand.hbm [shape: f32[112,128], index: 3, kind: input, shape index: {}]
  %s4 = inlined_call_operand.hbm [shape: f32[128,128], index: 4, kind: input, shape index: {}]
  %s5 = inlined_call_operand.hbm [shape: f32[16,128], index: 5, kind: output, shape index: {}]
  %s6 = sld [smem:[#allocation0]]
  $region61: #{tpu_custom_call.1} parent=0
    _
  %s8 = ssub.s32 1, %s6
  %s9 = scalar_select 0, %s8, %s6
  $region1: #{tpu_custom_call.1} parent=0
    #allocation2 [shape = 'u8[57344]{0}', space=vmem, size = 0xe000, scoped, tag = 'input window, operand 3, single buffered']
    #allocation3 [shape = 's32[2]{0}', space=sflag, size = 0x8, scoped, tag = 'scoped memory for tpu_custom_call.1']
    #allocation4 [shape = 's32[2]{0}', space=sflag, size = 0x8, scoped, tag = 'scoped memory for tpu_custom_call.1']
    #allocation5 [shape = 'u8[65536]{0}', space=vmem, size = 0x10000, scoped, tag = 'input window, operand 4, single buffered']
    #allocation6 [shape = 's32[1]{0}', space=sflag, size = 0x4, scoped, tag = 'scoped memory for tpu_custom_call.1']
    #allocation7 [shape = 'u8[8192]{0}', space=vmem, size = 0x2000, scoped, tag = 'output window, operand 0']
    %10 = vsyncpa [#allocation3], 0
    %11 = vsyncpa [#allocation6], 0
    %12 = vsyncpa [#allocation4], 0
    %s13 = scalar_lea.sflag [#allocation4], 1
    %14 = vsyncpa %s13, 0
    loop: start=0, step=1, limit=4
    $region2: #{tpu_custom_call.1} parent=1 // loop_pre_header
      _
    $region3: #{tpu_custom_call.1} parent=1 // loop_header
      %s16 = sphi 0, %s20
      %p17 = scmp.ge.s32.totalorder %s16, 4
      %s23 = sphi 0, %s35
      %s24 = sphi 0, %s31
      %s25 = sphi 0, %s23
      %s26 = sphi 0, %s24
      %s27 = sphi 0, %s25
      %s28 = sphi 0, %s26
      %s38 = sphi 0, %s40
      %s41 = sphi 0, %s38
      %s42 = sphi 0, %s41
      %s58 = sphi 0, %s42
      %s64 = sphi 0, %s66
      %s67 = sphi 0, %s64
      %s68 = sphi 0, %s67
      %s84 = sphi 0, %s68
      %s90 = sphi 0, %s92
      %s93 = sphi 0, %s90
      %s94 = sphi 0, %s93
      %s110 = sphi 0, %s94
      %s116 = sphi 0, %s118
      %s119 = sphi 0, %s116
      %s120 = sphi 0, %s119
      %s136 = sphi 0, %s120
      %s142 = sphi 0, %s144
      %s145 = sphi 0, %s142
      %s146 = sphi 0, %s145
      %s162 = sphi 0, %s146
      %s170 = sphi 0, %s172
      %s173 = sphi 0, %s170
      %s174 = sphi 0, %s173
      %s190 = sphi 0, %s174
    $region4: #{tpu_custom_call.1} parent=1 // loop_header_branch
      %19 = sbr.rel (%p17) target = $region8
    $region5: #{tpu_custom_call.1} parent=1 // loop_body
      %s21 = ssub.s32 %s16, 1
      %s22 = ssub.s32 %s16, 2
      %s29 = sadd.s32 1, %s24
      %p30 = scmp.ge.s32.totalorder %s29, 1
      %s31 = scalar_select %p30, 0, %s29
      %s32 = sadd.s32 1, %s23
      %s33 = scalar_select %p30, %s32, %s23
      %p34 = scmp.ge.s32.totalorder %s33, 2
      %s35 = scalar_select %p34, 0, %s33
      %s36 = ssub.s32 %s23, %s35
      %p37 = scmp.eq.s32.totalorder %s36, 0
      %s39 = sadd.s32 %s38, 1
      %s40 = scalar_select %p37, %s38, %s39
      %p43 = pneg %p37
      %p44 = scmp.eq.s32.totalorder %s16, 1
      %p45 = por %p43, %p44
      %p46 = scmp.ne.s32.totalorder %s38, %s41
      %p47 = scmp.eq.s32.totalorder %s16, 0
      %p48 = por %p46, %p47
      %p49 = scmp.ne.s32.totalorder %s38, %s41
      %p50 = scmp.eq.s32.totalorder %s21, 1
      %p51 = por %p49, %p50
      %p52 = scmp.ne.s32.totalorder %s41, %s42
      %p53 = scmp.eq.s32.totalorder %s21, 0
      %p54 = por %p52, %p53
      %p55 = scmp.ne.s32.totalorder %s41, %s42
      %p56 = scmp.eq.s32.totalorder %s22, 1
      %p57 = por %p55, %p56
      %p59 = scmp.ne.s32.totalorder %s42, %s58
      %p60 = scmp.eq.s32.totalorder %s22, 0
      %p61 = por %p59, %p60
      %s62 = ssub.s32 %s23, %s35
      %p63 = scmp.eq.s32.totalorder %s62, 0
      %s65 = sadd.s32 %s64, 1
      %s66 = scalar_select %p63, %s64, %s65
      %p69 = pneg %p63
      %p70 = scmp.eq.s32.totalorder %s16, 1
      %p71 = por %p69, %p70
      %p72 = scmp.ne.s32.totalorder %s64, %s67
      %p73 = scmp.eq.s32.totalorder %s16, 0
      %p74 = por %p72, %p73
      %p75 = scmp.ne.s32.totalorder %s64, %s67
      %p76 = scmp.eq.s32.totalorder %s21, 1
      %p77 = por %p75, %p76
      %p78 = scmp.ne.s32.totalorder %s67, %s68
      %p79 = scmp.eq.s32.totalorder %s21, 0
      %p80 = por %p78, %p79
      %p81 = scmp.ne.s32.totalorder %s67, %s68
      %p82 = scmp.eq.s32.totalorder %s22, 1
      %p83 = por %p81, %p82
      %p85 = scmp.ne.s32.totalorder %s68, %s84
      %p86 = scmp.eq.s32.totalorder %s22, 0
      %p87 = por %p85, %p86
      %s88 = ssub.s32 %s23, %s35
      %p89 = scmp.eq.s32.totalorder %s88, 0
      %s91 = sadd.s32 %s90, 1
      %s92 = scalar_select %p89, %s90, %s91
      %p95 = pneg %p89
      %p96 = scmp.eq.s32.totalorder %s16, 1
      %p97 = por %p95, %p96
      %p98 = scmp.ne.s32.totalorder %s90, %s93
      %p99 = scmp.eq.s32.totalorder %s16, 0
      %p100 = por %p98, %p99
      %p101 = scmp.ne.s32.totalorder %s90, %s93
      %p102 = scmp.eq.s32.totalorder %s21, 1
      %p103 = por %p101, %p102
      %p104 = scmp.ne.s32.totalorder %s93, %s94
      %p105 = scmp.eq.s32.totalorder %s21, 0
      %p106 = por %p104, %p105
      %p107 = scmp.ne.s32.totalorder %s93, %s94
      %p108 = scmp.eq.s32.totalorder %s22, 1
      %p109 = por %p107, %p108
      %p111 = scmp.ne.s32.totalorder %s94, %s110
      %p112 = scmp.eq.s32.totalorder %s22, 0
      %p113 = por %p111, %p112
      %s114 = ssub.s32 %s24, %s31
      %p115 = scmp.eq.s32.totalorder %s114, 0
      %s117 = sadd.s32 %s116, 1
      %s118 = scalar_select %p115, %s116, %s117
      %p121 = pneg %p115
      %p122 = scmp.eq.s32.totalorder %s16, 1
      %p123 = por %p121, %p122
      %p124 = scmp.ne.s32.totalorder %s116, %s119
      %p125 = scmp.eq.s32.totalorder %s16, 0
      %p126 = por %p124, %p125
      %p127 = scmp.ne.s32.totalorder %s116, %s119
      %p128 = scmp.eq.s32.totalorder %s21, 1
      %p129 = por %p127, %p128
      %p130 = scmp.ne.s32.totalorder %s119, %s120
      %p131 = scmp.eq.s32.totalorder %s21, 0
      %p132 = por %p130, %p131
      %p133 = scmp.ne.s32.totalorder %s119, %s120
      %p134 = scmp.eq.s32.totalorder %s22, 1
      %p135 = por %p133, %p134
      %p137 = scmp.ne.s32.totalorder %s120, %s136
      %p138 = scmp.eq.s32.totalorder %s22, 0
      %p139 = por %p137, %p138
      %s140 = ssub.s32 %s24, %s31
      %p141 = scmp.eq.s32.totalorder %s140, 0
      %s143 = sadd.s32 %s142, 1
      %s144 = scalar_select %p141, %s142, %s143
      %p147 = pneg %p141
      %p148 = scmp.eq.s32.totalorder %s16, 1
      %p149 = por %p147, %p148
      %p150 = scmp.ne.s32.totalorder %s142, %s145
      %p151 = scmp.eq.s32.totalorder %s16, 0
      %p152 = por %p150, %p151
      %p153 = scmp.ne.s32.totalorder %s142, %s145
      %p154 = scmp.eq.s32.totalorder %s21, 1
      %p155 = por %p153, %p154
      %p156 = scmp.ne.s32.totalorder %s145, %s146
      %p157 = scmp.eq.s32.totalorder %s21, 0
      %p158 = por %p156, %p157
      %p159 = scmp.ne.s32.totalorder %s145, %s146
      %p160 = scmp.eq.s32.totalorder %s22, 1
      %p161 = por %p159, %p160
      %p163 = scmp.ne.s32.totalorder %s146, %s162
      %p164 = scmp.eq.s32.totalorder %s22, 0
      %p165 = por %p163, %p164
      %s166 = ssub.s32 %s23, %s35
      %s167 = ssub.s32 %s24, %s31
      %s168 = sor.u32 %s166, %s167
      %p169 = scmp.eq.s32.totalorder %s168, 0
      %s171 = sadd.s32 %s170, 1
      %s172 = scalar_select %p169, %s170, %s171
      %p175 = pneg %p169
      %p176 = scmp.eq.s32.totalorder %s16, 1
      %p177 = por %p175, %p176
      %p178 = scmp.ne.s32.totalorder %s170, %s173
      %p179 = scmp.eq.s32.totalorder %s16, 0
      %p180 = por %p178, %p179
      %p181 = scmp.ne.s32.totalorder %s170, %s173
      %p182 = scmp.eq.s32.totalorder %s21, 1
      %p183 = por %p181, %p182
      %p184 = scmp.ne.s32.totalorder %s173, %s174
      %p185 = scmp.eq.s32.totalorder %s21, 0
      %p186 = por %p184, %p185
      %p187 = scmp.ne.s32.totalorder %s173, %s174
      %p188 = scmp.eq.s32.totalorder %s22, 1
      %p189 = por %p187, %p188
      %p191 = scmp.ne.s32.totalorder %s174, %s190
      %p192 = scmp.eq.s32.totalorder %s22, 0
      %p193 = por %p191, %p192
      %p194 = scmp.le.s32.totalorder 1, %s16
      %p195 = scmp.lt.s32.totalorder %s16, 3
      %p196 = pnand %p194, %p195
      %p197 = pneg %p196
      // Predicated region
      $region9: #{tpu_custom_call.1} parent=5 // pred_check
        _
      $region10: #{tpu_custom_call.1} parent=5 // pred_check_branch
        %199 = sbr.rel (%p196) target = $region12
      $region11: #{tpu_custom_call.1} parent=5 // pred_region
        %s200 = ssub.s32 %s16, 1
        // Predicated region
        $region13: #{tpu_custom_call.1} parent=11 // pred_check
          %p201 = pneg %p132
        $region14: #{tpu_custom_call.1} parent=11 // pred_check_branch
          %203 = sbr.rel (%p201) target = $region16
        $region15: #{tpu_custom_call.1} parent=11 // pred_region
          %205 = vsyncadd [#allocation3], 0
          %s206 = smul.addr %s26, 8
          %s207 = scalar_lea.hbm %s3, %s206
          %s208 = sshll.u32 %s207, 4
          %s209 = int_to_ptr.hbm [resolvable:$true] %s208
          %s210 = sshll.u32 [#allocation2], 4
          %s211 = int_to_ptr.vmem [resolvable:$true] %s210
          %216 = dma.hbm_to_vmem [thread:$0]  %s209, 1792, %s211, [#allocation3], 128, 128, 8
        $region16: #{tpu_custom_call.1} parent=11 // pred_fallthru
          _
        // Predicated region
        $region17: #{tpu_custom_call.1} parent=11 // pred_check
          %p217 = pneg %p158
        $region18: #{tpu_custom_call.1} parent=11 // pred_check_branch
          %219 = sbr.rel (%p217) target = $region20
        $region19: #{tpu_custom_call.1} parent=11 // pred_region
          %221 = vsyncadd [#allocation6], 0
          %s222 = smul.addr %s26, 8
          %s223 = scalar_lea.hbm %s4, %s222
          %s224 = sshll.u32 %s223, 4
          %s225 = int_to_ptr.hbm [resolvable:$true] %s224
          %s226 = sshll.u32 [#allocation5], 4
          %s227 = int_to_ptr.vmem [resolvable:$true] %s226
          %232 = dma.hbm_to_vmem [thread:$0]  %s225, 2048, %s227, [#allocation6], 128, 128, 8
        $region20: #{tpu_custom_call.1} parent=11 // pred_fallthru
          _
      $region12: #{tpu_custom_call.1} parent=5 // pred_fallthru
        _
      %p233 = scmp.lt.s32.totalorder %s16, 2
      // Predicated region
      $region21: #{tpu_custom_call.1} parent=5 // pred_check
        %p234 = pneg %p233
      $region22: #{tpu_custom_call.1} parent=5 // pred_check_branch
        %236 = sbr.rel (%p234) target = $region24
      $region23: #{tpu_custom_call.1} parent=5 // pred_region
        // Predicated region
        $region25: #{tpu_custom_call.1} parent=23 // pred_check
          %p237 = pneg %p48
        $region26: #{tpu_custom_call.1} parent=23 // pred_check_branch
          %239 = sbr.rel (%p237) target = $region28
        $region27: #{tpu_custom_call.1} parent=23 // pred_region
          %p240 = scmp.lt.s32.totalorder %s23, 1
          %s241 = scalar_select %p240, %s23, 1
          %s242 = smul.addr %s241, 8
          %s243 = scalar_lea.vmem %s0, %s242
        $region28: #{tpu_custom_call.1} parent=23 // pred_fallthru
          _
        // Predicated region
        $region29: #{tpu_custom_call.1} parent=23 // pred_check
          %p244 = pneg %p74
        $region30: #{tpu_custom_call.1} parent=23 // pred_check_branch
          %246 = sbr.rel (%p244) target = $region32
        $region31: #{tpu_custom_call.1} parent=23 // pred_region
          %p247 = scmp.lt.s32.totalorder %s23, 1
          %s248 = scalar_select %p247, %s23, 1
          %s249 = smul.addr %s248, 8
          %s250 = scalar_lea.vmem %s1, %s249
        $region32: #{tpu_custom_call.1} parent=23 // pred_fallthru
          _
        // Predicated region
        $region33: #{tpu_custom_call.1} parent=23 // pred_check
          %p251 = pneg %p100
        $region34: #{tpu_custom_call.1} parent=23 // pred_check_branch
          %253 = sbr.rel (%p251) target = $region36
        $region35: #{tpu_custom_call.1} parent=23 // pred_region
          %p254 = scmp.lt.s32.totalorder %s23, 1
          %s255 = scalar_select %p254, %s23, 1
          %s256 = smul.addr %s255, 8
          %s257 = scalar_lea.vmem %s2, %s256
        $region36: #{tpu_custom_call.1} parent=23 // pred_fallthru
          _
      $region24: #{tpu_custom_call.1} parent=5 // pred_fallthru
        _
      %p258 = scmp.le.s32.totalorder 1, %s16
      %p259 = scmp.lt.s32.totalorder %s16, 3
      %p260 = pnand %p258, %p259
      %p261 = pneg %p260
      // Predicated region
      $region37: #{tpu_custom_call.1} parent=5 // pred_check
        _
      $region38: #{tpu_custom_call.1} parent=5 // pred_check_branch
        %263 = sbr.rel (%p260) target = $region40
      $region39: #{tpu_custom_call.1} parent=5 // pred_region
        %s264 = ssub.s32 %s16, 1
        // Predicated region
        $region41: #{tpu_custom_call.1} parent=39 // pred_check
          %p265 = pneg %p132
        $region42: #{tpu_custom_call.1} parent=39 // pred_check_branch
          %267 = sbr.rel (%p265) target = $region44
        $region43: #{tpu_custom_call.1} parent=39 // pred_region
          %269 = dma.done [#allocation3], 1792
        $region44: #{tpu_custom_call.1} parent=39 // pred_fallthru
          _
        // Predicated region
        $region45: #{tpu_custom_call.1} parent=39 // pred_check
          %p270 = pneg %p158
        $region46: #{tpu_custom_call.1} parent=39 // pred_check_branch
          %272 = sbr.rel (%p270) target = $region48
        $region47: #{tpu_custom_call.1} parent=39 // pred_region
          %274 = dma.done [#allocation6], 2048
        $region48: #{tpu_custom_call.1} parent=39 // pred_fallthru
          _
        %p275 = scmp.lt.s32.totalorder %s25, 1
        %s276 = scalar_select %p275, %s25, 1
        %s277 = smul.addr %s276, 8
        %s278 = scalar_lea.vmem %s0, %s277
        %p279 = pneg %p54
        %p280 = pneg %p51
        %p281 = scmp.lt.s32.totalorder %s25, 1
        %s282 = scalar_select %p281, %s25, 1
        %s283 = smul.addr %s282, 8
        %s284 = scalar_lea.vmem %s1, %s283
        %p285 = pneg %p80
        %p286 = pneg %p77
        %p287 = scmp.lt.s32.totalorder %s25, 1
        %s288 = scalar_select %p287, %s25, 1
        %s289 = smul.addr %s288, 8
        %s290 = scalar_lea.vmem %s2, %s289
        %p291 = pneg %p106
        %p292 = pneg %p103
        %p293 = pneg %p132
        %p294 = pneg %p129
        %p295 = pneg %p158
        %p296 = pneg %p155
        %p297 = pneg %p186
        %p298 = pneg %p183
        %s299 = sand.u32 %s173, 1
        %s300 = scalar_lea.sflag [#allocation4], %s299
        %s301 = sand.u32 %s173, 1
        %s302 = smul.addr %s301, 8
        %s303 = scalar_lea.vmem [#allocation7], %s302
        %p304 = scmp.lt.s32.totalorder %s25, 1
        %s305 = scalar_select %p304, %s25, 1
        %s306 = smul.addr %s305, 8
        %s307 = scalar_lea.vmem %s0, %s306
        %p308 = scmp.lt.s32.totalorder %s25, 1
        %s309 = scalar_select %p308, %s25, 1
        %s310 = smul.addr %s309, 8
        %s311 = scalar_lea.vmem %s1, %s310
        %p312 = scmp.lt.s32.totalorder %s25, 1
        %s313 = scalar_select %p312, %s25, 1
        %s314 = smul.addr %s313, 8
        %s315 = scalar_lea.vmem %s2, %s314
        %v316 = vlaneseq
        %v317 = vand.u32 %v316, 127
        %vm318 = vcmp.lt.s32.totalorder %v317, 120
        %v319 = vld [vmem:[%s311] sm:$0xff]
        %v320 = vld [vmem:[%s315] sm:$0xff]
        %v321 = vadd.s32 %v320, 120
        %322 = vset.pattern.permute.xlu0 0
        %323 = vperm.xlu0 %322, %v319
        %v324 = vpop.permute.xlu0 %323
        %325 = vset.pattern.permute.xlu0 0
        %326 = vperm.xlu0 %325, %v321
        %v327 = vpop.permute.xlu0 %326
        %v328 = vsel %vm318, %v324, %v327
        %vm329 = vcmp.eq.s32.totalorder %v317, %v328
        %v330 = vsel %vm329, 1, 0
        %v331 = vcvt.s32.f32 %v330
        %v332 = vld [vmem:[%s307] sm:$0xff]
        %v333 = vld [vmem:[#allocation2] sm:$0xff]
        %v334 = vld [vmem:[#allocation2 + $0x8] sm:$0xff]
        %v335 = vld [vmem:[#allocation2 + $0x10] sm:$0xff]
        %v336 = vld [vmem:[#allocation2 + $0x18] sm:$0xff]
        %v337 = vld [vmem:[#allocation2 + $0x20] sm:$0xff]
        %v338 = vld [vmem:[#allocation2 + $0x28] sm:$0xff]
        %v339 = vld [vmem:[#allocation2 + $0x30] sm:$0xff]
        %v340 = vld [vmem:[#allocation2 + $0x38] sm:$0xff]
        %v341 = vld [vmem:[#allocation2 + $0x40] sm:$0xff]
        %v342 = vld [vmem:[#allocation2 + $0x48] sm:$0xff]
        %v343 = vld [vmem:[#allocation2 + $0x50] sm:$0xff]
        %v344 = vld [vmem:[#allocation2 + $0x58] sm:$0xff]
        %v345 = vld [vmem:[#allocation2 + $0x60] sm:$0xff]
        %v346 = vld [vmem:[#allocation2 + $0x68] sm:$0xff]
        %v347 = vld [vmem:[#allocation5] sm:$0xff]
        %v348 = vld [vmem:[#allocation5 + $0x8] sm:$0xff]
        %v349 = vld [vmem:[#allocation5 + $0x10] sm:$0xff]
        %v350 = vld [vmem:[#allocation5 + $0x18] sm:$0xff]
        %v351 = vld [vmem:[#allocation5 + $0x20] sm:$0xff]
        %v352 = vld [vmem:[#allocation5 + $0x28] sm:$0xff]
        %v353 = vld [vmem:[#allocation5 + $0x30] sm:$0xff]
        %v354 = vld [vmem:[#allocation5 + $0x38] sm:$0xff]
        %v355 = vld [vmem:[#allocation5 + $0x40] sm:$0xff]
        %v356 = vld [vmem:[#allocation5 + $0x48] sm:$0xff]
        %v357 = vld [vmem:[#allocation5 + $0x50] sm:$0xff]
        %v358 = vld [vmem:[#allocation5 + $0x58] sm:$0xff]
        %v359 = vld [vmem:[#allocation5 + $0x60] sm:$0xff]
        %v360 = vld [vmem:[#allocation5 + $0x68] sm:$0xff]
        %v361 = vld [vmem:[#allocation5 + $0x70] sm:$0xff]
        %v362 = vld [vmem:[#allocation5 + $0x78] sm:$0xff]
        %363 = vmatpush.msra.mxu0 %v362
        %364 = vmatpush.msra.mxu0 %v361
        %365 = vmatpush.msra.mxu0 %v360
        %366 = vmatpush.msra.mxu0 %v359
        %367 = vmatpush.msra.mxu0 %v358
        %368 = vmatpush.msra.mxu0 %v357
        %369 = vmatpush.msra.mxu0 %v356
        %370 = vmatpush.msra.mxu0 %v355
        %371 = vmatpush.msra.mxu0 %v354
        %372 = vmatpush.msra.mxu0 %v353
        %373 = vmatpush.msra.mxu0 %v352
        %374 = vmatpush.msra.mxu0 %v351
        %375 = vmatpush.msra.mxu0 %v350
        %376 = vmatpush.msra.mxu0 %v349
        %377 = vmatpush.msra.mxu0 %v348
        %378 = vmatpush.msra.mxu0 %v347
        %379 = vmatmul.f32.gmra.mxu0 %v331
        %v380 = vpop.f32.mrf.mxu0
        %v381 = vadd.f32 0.0, %v380
        %382 = vdwg.mxu0
        %vm383 = vcmask 916480
        %v385 = vsel %vm383, %v332, 0
        %387 = vmatpush.msra.mxu0 0.0
        %388 = vmatpush.msra.mxu0 0.0
        %389 = vmatpush.msra.mxu0 %v346
        %390 = vmatpush.msra.mxu0 %v345
        %391 = vmatpush.msra.mxu0 %v344
        %392 = vmatpush.msra.mxu0 %v343
        %393 = vmatpush.msra.mxu0 %v342
        %394 = vmatpush.msra.mxu0 %v341
        %395 = vmatpush.msra.mxu0 %v340
        %396 = vmatpush.msra.mxu0 %v339
        %397 = vmatpush.msra.mxu0 %v338
        %398 = vmatpush.msra.mxu0 %v337
        %399 = vmatpush.msra.mxu0 %v336
        %400 = vmatpush.msra.mxu0 %v335
        %401 = vmatpush.msra.mxu0 %v334
        %402 = vmatpush.msra.mxu0 %v333
        %403 = vmatmul.f32.gmra.mxu0 %v385
        %v404 = vpop.f32.mrf.mxu0
        %v405 = vadd.f32 %v381, %v404
        %406 = vdwg.mxu0
        %407 = vst [vmem:[%s303] sm:$0xff] %v405
        %s408 = sand.u32 %s173, 1
        %s409 = scalar_lea.sflag [#allocation4], %s408
        %s410 = sand.u32 %s173, 1
        %s411 = smul.addr %s410, 8
        %s412 = scalar_lea.vmem [#allocation7], %s411
        // Predicated region
        $region49: #{tpu_custom_call.1} parent=39 // pred_check
          %p413 = pneg %p183
        $region50: #{tpu_custom_call.1} parent=39 // pred_check_branch
          %415 = sbr.rel (%p413) target = $region52
        $region51: #{tpu_custom_call.1} parent=39 // pred_region
          %417 = vsyncadd %s409, 0
          %s418 = sadd.s32 %s26, %s25
          %s419 = smul.addr %s418, 8
          %s420 = scalar_lea.hbm %s5, %s419
          %s422 = sshll.u32 %s412, 4
          %s423 = int_to_ptr.vmem [resolvable:$true] %s422
          %s424 = sshll.u32 %s420, 4
          %s425 = int_to_ptr.hbm [resolvable:$true] %s424
          %427 = dma.vmem_to_hbm [thread:$0]  %s423, 128, %s425, %s409
        $region52: #{tpu_custom_call.1} parent=39 // pred_fallthru
          _
      $region40: #{tpu_custom_call.1} parent=5 // pred_fallthru
        _
      %p428 = scmp.le.s32.totalorder 2, %s16
      // Predicated region
      $region53: #{tpu_custom_call.1} parent=5 // pred_check
        %p429 = pneg %p428
      $region54: #{tpu_custom_call.1} parent=5 // pred_check_branch
        %431 = sbr.rel (%p429) target = $region56
      $region55: #{tpu_custom_call.1} parent=5 // pred_region
        %s432 = ssub.s32 %s16, 2
        // Predicated region
        $region57: #{tpu_custom_call.1} parent=55 // pred_check
          %p433 = pneg %p189
        $region58: #{tpu_custom_call.1} parent=55 // pred_check_branch
          %435 = sbr.rel (%p433) target = $region60
        $region59: #{tpu_custom_call.1} parent=55 // pred_region
          %s436 = sand.u32 %s174, 1
          %s437 = scalar_lea.sflag [#allocation4], %s436
          %s438 = sand.u32 %s174, 1
          %s439 = smul.addr %s438, 8
          %s440 = scalar_lea.vmem [#allocation7], %s439
          %442 = dma.done %s437, 128
        $region60: #{tpu_custom_call.1} parent=55 // pred_fallthru
          _
      $region56: #{tpu_custom_call.1} parent=5 // pred_fallthru
        _
    $region6: #{tpu_custom_call.1} parent=1 // loop_footer
      %s20 = sadd.s32 1, %s16
    $region7: #{tpu_custom_call.1} parent=1 // loop_footer_branch
      %15 = sbr.rel target = $region3
    $region8: #{tpu_custom_call.1} parent=1 // loop_exit
      _
    %443 = vsyncpa [#allocation3], 1
    %s444 = scalar_lea.sflag [#allocation3], 1
    %445 = vsyncpa %s444, 1
    %446 = vsyncpa [#allocation6], 1
    %447 = vsyncpa [#allocation4], 1
    %s448 = scalar_lea.sflag [#allocation4], 1
    %449 = vsyncpa %s448, 1

</llo_original>
